<compile_context>
chip_gen: v7x
topology: tpu7x:2x2x1
jax: 0.10.0
libtpu: 0.0.40
codegen_flags: <defaults>
</compile_context>

<pallas_src>
import jax
import jax.numpy as jnp
from jax.experimental import pallas as pl
from jax.experimental.pallas import tpu as pltpu

HIDDEN_SIZE = 6  # matches the reference script's `hidden_size = 6`

_VMEM = pl.BlockSpec(memory_space=pltpu.MemorySpace.VMEM)


# ----------------------------- kernels ------------------------------------ #

def _softmax_last(x):
    """Numerically-stable softmax along the last (lane) axis."""
    m = jnp.max(x, axis=-1, keepdims=True)
    e = jnp.exp(x - m)
    s = jnp.sum(e, axis=-1, keepdims=True)
    return e * pl.reciprocal(s, approx=True)


def _dot_kernel(h_ref, e_ref, out_ref):
    # h: (B, 1, H), e: (B, L, H) -> out: (B, L) (softmax over L)
    scores = jnp.sum(h_ref[...] * e_ref[...], axis=-1)        # (B, L)
    out_ref[...] = _softmax_last(scores)


def _concat_kernel(pre_ref, e_ref, w2t_ref, v_ref, out_ref):
    # pre: (B,1,H) = hidden @ W1^T + b ; e: (B,L,H); w2t: (H,H) = W2^T; v: (1,1,H)
    e = e_ref[...]                                            # (B, L, H)
    w2t = w2t_ref[...]                                        # (H, H)
    H = e.shape[-1]
    # enc @ W2^T as an unrolled broadcast-MAC over the 6-wide contraction (VPU,
    # no MXU push/pop for a 36-MAC matmul).
    acc = pre_ref[...] + e[:, :, 0:1] * w2t[0:1, :]           # (B, L, H)
    for k in range(1, H):
        acc = acc + e[:, :, k:k + 1] * w2t[k:k + 1, :]
    energy = jnp.tanh(acc)                                    # (B, L, H)
    scores = jnp.sum(v_ref[...] * energy, axis=-1)            # (B, L)
    out_ref[...] = _softmax_last(scores)


# --------------------------- pallas_call wrappers -------------------------- #

def _call_dot(h_b, e_b):
    B, L, _ = e_b.shape
    return pl.pallas_call(
        _dot_kernel,
        out_shape=jax.ShapeDtypeStruct((B, L), jnp.float32),
        in_specs=[_VMEM, _VMEM],
        out_specs=_VMEM,
    )(h_b, e_b)


def _call_concat(pre, e_b, w2t, v3):
    B, L, _ = e_b.shape
    return pl.pallas_call(
        _concat_kernel,
        out_shape=jax.ShapeDtypeStruct((B, L), jnp.float32),
        in_specs=[_VMEM] * 4,
        out_specs=_VMEM,
    )(pre, e_b, w2t, v3)


# ----------------------------- module wrapper ------------------------------ #

class AttnPallas:
    """JAX/Pallas port of the PyTorch Attn module (forward pass)."""

    def __init__(self, method, hidden_size, key):
        if method not in ('dot', 'general', 'concat'):
            raise ValueError(method, 'is not an appropriate attention method.')
        self.method = method
        self.hidden_size = hidden_size
        h = hidden_size

        if method == 'general':
            k1, k2 = jax.random.split(key)
            bound = 1.0 / (h ** 0.5)
            # PyTorch Linear layout: W is (out, in), bias is (out,)
            self.w = jax.random.uniform(k1, (h, h), jnp.float32, -bound, bound)
            self.b = jax.random.uniform(k2, (h,), jnp.float32, -bound, bound)
        elif method == 'concat':
            k1, k2, k3 = jax.random.split(key, 3)
            bound = 1.0 / ((2 * h) ** 0.5)
            self.w = jax.random.uniform(k1, (h, 2 * h), jnp.float32, -bound, bound)
            self.b = jax.random.uniform(k2, (h,), jnp.float32, -bound, bound)
            self.v = jax.random.normal(k3, (h,), jnp.float32)
            # hoisted parameter prep (built once, device arrays)
            self._w1t = self.w[:, :h].T       # (H, H) = W1^T   (acts on hidden)
            self._w2t = self.w[:, h:].T       # (H, H) = W2^T   (acts on enc)
            self._v3 = self.v.reshape(1, 1, h)

        # Build a jitted forward per method so every call is a single dispatch.
        if method == 'dot':
            def fwd(hidden, enc):
                h_b = jnp.transpose(hidden, (1, 0, 2))        # (B, 1, H)
                e_b = jnp.transpose(enc, (1, 0, 2))           # (B, L, H)
                attn = _call_dot(h_b, e_b)                    # (B, L)
                return attn[:, None, :]                       # (B, 1, L)
        elif method == 'general':
            w = self.w
            def fwd(hidden, enc):
                h_b = jnp.transpose(hidden, (1, 0, 2))
                e_b = jnp.transpose(enc, (1, 0, 2))
                # collapsed 'general': score = enc . (h @ W) (+ h.b, a per-row
                # constant that cancels in the row softmax -> dropped).
                hp = (h_b[:, 0, :] @ w)[:, None, :]           # (B, 1, H)
                attn = _call_dot(hp, e_b)
                return attn[:, None, :]
        else:  # concat
            w1t, w2t, b, v3 = self._w1t, self._w2t, self.b, self._v3
            def fwd(hidden, enc):
                h_b = jnp.transpose(hidden, (1, 0, 2))
                e_b = jnp.transpose(enc, (1, 0, 2))
                pre = (h_b[:, 0, :] @ w1t + b)[:, None, :]    # (B, 1, H), L-indep.
                attn = _call_concat(pre, e_b, w2t, v3)
                return attn[:, None, :]

        self._fwd = jax.jit(fwd)

    def __call__(self, hidden, encoder_outputs):
        # hidden: (1, B, H), encoder_outputs: (L, B, H) -> (B, 1, L)
        return self._fwd(hidden, encoder_outputs)


# ----------------------------- pure-JAX reference --------------------------- #

def _ref_attn(method, params, hidden, enc):
    if method == 'dot':
        scores = jnp.sum(hidden * enc, axis=2)                          # (L, B)
    elif method == 'general':
        w, b = params
        energy = jnp.einsum('lbk,jk->lbj', enc, w) + b
        scores = jnp.sum(hidden * energy, axis=2)
    else:
        w, b, v = params
        cat = jnp.concatenate([jnp.broadcast_to(hidden, enc.shape), enc], axis=2)
        energy = jnp.tanh(jnp.einsum('lbc,jc->lbj', cat, w) + b)
        scores = jnp.sum(v * energy, axis=2)
    return jax.nn.softmax(scores.T, axis=1)[:, None, :]


if __name__ == "__main__":
    key = jax.random.PRNGKey(0)
    k_h, k_e, k_p1, k_p2, k_p3 = jax.random.split(key, 5)

    B, L, H = 2, 8, HIDDEN_SIZE
    hidden = jax.random.normal(k_h, (1, B, H), jnp.float32)
    encoder_outputs = jax.random.normal(k_e, (L, B, H), jnp.float32)

    for method, pkey in (('dot', k_p1), ('general', k_p2), ('concat', k_p3)):
        attn = AttnPallas(method, H, pkey)
        out = jax.block_until_ready(attn(hidden, encoder_outputs))
        assert out.shape == (B, 1, L), out.shape

        if method == 'dot':
            params = None
        elif method == 'general':
            params = (attn.w, attn.b)
        else:
            params = (attn.w, attn.b, attn.v)
        ref = _ref_attn(method, params, hidden, encoder_outputs)
        # tolerance covers the EUP approximate reciprocal in the softmax
        assert jnp.allclose(out, ref, atol=2e-3, rtol=2e-3), (
            method, float(jnp.max(jnp.abs(out - ref))))

    print("KERNEL_OK")
</pallas_src>

<mosaic_0001>
module attributes {stable_mosaic.version = 11 : i64} {
  func.func @_dot_kernel(%arg0: memref<2x1x6xf32, #tpu.memory_space<vmem>>, %arg1: memref<2x8x6xf32, #tpu.memory_space<vmem>>, %arg2: memref<2x8xf32, #tpu.memory_space<vmem>>) attributes {dimension_semantics = [], scalar_prefetch = 0 : i64, scratch_operands = 0 : i64, tpu.core_type = #tpu.core_type<tc>} {
    %c0 = arith.constant 0 : index
    %c0_0 = arith.constant 0 : index
    %c0_1 = arith.constant 0 : index
    %0 = vector.load %arg0[%c0, %c0_0, %c0_1] : memref<2x1x6xf32, #tpu.memory_space<vmem>>, vector<2x1x6xf32>
    %c0_2 = arith.constant 0 : index
    %c0_3 = arith.constant 0 : index
    %c0_4 = arith.constant 0 : index
    %1 = vector.load %arg1[%c0_2, %c0_3, %c0_4] : memref<2x8x6xf32, #tpu.memory_space<vmem>>, vector<2x8x6xf32>
    %2 = vector.broadcast %0 : vector<2x1x6xf32> to vector<2x8x6xf32>
    %3 = arith.mulf %2, %1 : vector<2x8x6xf32>
    %cst = arith.constant dense<0.000000e+00> : vector<2x8xf32>
    %4 = vector.multi_reduction <add>, %3, %cst [2] : vector<2x8x6xf32> to vector<2x8xf32>
    %cst_5 = arith.constant dense<0xFF800000> : vector<2xf32>
    %5 = vector.multi_reduction <maximumf>, %4, %cst_5 [1] : vector<2x8xf32> to vector<2xf32>
    %6 = vector.shape_cast %5 : vector<2xf32> to vector<2x1xf32>
    %7 = vector.broadcast %6 : vector<2x1xf32> to vector<2x8xf32>
    %8 = arith.subf %4, %7 : vector<2x8xf32>
    %9 = math.exp %8 : vector<2x8xf32>
    %cst_6 = arith.constant dense<0.000000e+00> : vector<2xf32>
    %10 = vector.multi_reduction <add>, %9, %cst_6 [1] : vector<2x8xf32> to vector<2xf32>
    %11 = vector.shape_cast %10 : vector<2xf32> to vector<2x1xf32>
    %12 = tpu.reciprocal %11 {approx = true} : vector<2x1xf32> -> vector<2x1xf32>
    %13 = vector.broadcast %12 : vector<2x1xf32> to vector<2x8xf32>
    %14 = arith.mulf %9, %13 : vector<2x8xf32>
    %c0_7 = arith.constant 0 : index
    %c0_8 = arith.constant 0 : index
    %15 = vector.load %arg2[%c0_7, %c0_8] : memref<2x8xf32, #tpu.memory_space<vmem>>, vector<2x8xf32>
    tpu.vector_store %arg2[%c0_7, %c0_8], %14 {strides = array<i32>} : memref<2x8xf32, #tpu.memory_space<vmem>>, vector<2x8xf32>,
    return
  }
}

</mosaic_0001>

<llo_original>
// kernel: fwd.1
$region0: #{fwd.1}
  #allocation0 [shape = 'u32[]', space=smem, size = 0x4, offset = 0x4, fixed_abs, tag = 'smem constant byte address 0x4 - core index']
  #allocation1 [shape = 'u32[144,128]{1,0:T(1,128)}', space=vmem, size = 0x12000, scoped, tag = 'internal scratch']
  %s0 = inlined_call_operand.vmem [shape: f32[2,1,6], index: 0, kind: input, shape index: {}]
  %s1 = inlined_call_operand.vmem [shape: f32[2,8,6], index: 1, kind: input, shape index: {}]
  %s2 = inlined_call_operand.hbm [shape: f32[2,8], index: 2, kind: output, shape index: {}]
  %s3 = sld [smem:[#allocation0]]
  $region18: #{fwd.1} parent=0
    _
  %s5 = ssub.s32 1, %s3
  %s6 = scalar_select 0, %s5, %s3
  $region1: #{fwd.1} parent=0
    #allocation2 [shape = 'u8[1024]{0}', space=vmem, size = 0x400, scoped, tag = 'output window, operand 0, single buffered']
    #allocation3 [shape = 's32[1]{0}', space=sflag, size = 0x4, scoped, tag = 'scoped memory for fwd.1']
    %7 = vsyncpa [#allocation3], 0
    // Predicated region
    $region2: #{fwd.1} parent=1 // pred_check
      _
    $region3: #{fwd.1} parent=1 // pred_check_branch
      %9 = sbr.rel (0) target = $region5
    $region4: #{fwd.1} parent=1 // pred_region
      _
    $region5: #{fwd.1} parent=1 // pred_fallthru
      _
    // Predicated region
    $region6: #{fwd.1} parent=1 // pred_check
      _
    $region7: #{fwd.1} parent=1 // pred_check_branch
      %11 = sbr.rel (0) target = $region9
    $region8: #{fwd.1} parent=1 // pred_region
      _
    $region9: #{fwd.1} parent=1 // pred_fallthru
      _
    %v12 = vld [vmem:[%s0] sm:$0x1]
    %v13 = vld [vmem:[%s0 + $0x1] sm:$0x1]
    %v14 = vld [vmem:[%s1] sm:$0xff]
    %v15 = vld [vmem:[%s1 + $0x8] sm:$0xff]
    %v18 = vlaneseq
    %v19 = vshrl.u32 %v18, 7
    %v20 = vsub.s32 0, %v19
    %v21 = vrot.slane %v12, %v20
    %v22 = vlaneseq
    %v23 = vshrl.u32 %v22, 7
    %v24 = vsub.s32 0, %v23
    %v25 = vrot.slane %v13, %v24
    %v28 = vmul.f32 %v21, %v14
    %v29 = vmul.f32 %v25, %v15
    %vm30 = vcmask 48128
    %v31 = vsel %vm30, %v28, 0.0
    %32 = vadd.xlane.f32.xlu0 %v31
    %v33 = vpop.xlane.xlu0 %32
    %v34 = vsel %vm30, %v29, 0.0
    %35 = vadd.xlane.f32.xlu0 %v34
    %v36 = vpop.xlane.xlu0 %35
    %v39 = vlaneseq
    %v40 = vand.u32 %v39, 127
    %v41 = vlaneseq
    %v42 = vshrl.u32 %v41, 7
    %v43 = vsub.s32 %v40, %v42
    %v44 = vrot.slane %v33, %v43
    %v45 = vlaneseq
    %v46 = vshrl.u32 %v45, 7
    %v47 = vsub.s32 %v40, %v46
    %v48 = vrot.slane %v36, %v47
    %vm49 = vcmask 1041409
    %v50 = vsel %vm49, %v48, %v44
    %vm52 = vcmask 58368
    %v53 = vsel %vm52, %v50, -inf
    %54 = vmax.xlane.f32.xlu0 %v53
    %v55 = vpop.xlane.xlu0 %54
    %v57 = vlaneseq
    %v58 = vshrl.u32 %v57, 7
    %v59 = vsub.s32 0, %v58
    %v60 = vrot.slane %v55, %v59
    %v61 = vlaneseq
    %v62 = vshrl.u32 %v61, 7
    %v63 = vsub.s32 1, %v62
    %v64 = vrot.slane %v55, %v63
    %v67 = vsub.f32 %v33, %v60
    %v68 = vsub.f32 %v36, %v64
    %v69 = vmul.f32 %v67, 1.442695
    %v70 = vpow.pop %v69
    %v71 = vmul.f32 %v68, 1.442695
    %v72 = vpow.pop %v71
    %75 = vset.pattern.permute.xlu0 0
    %76 = vperm.xlu0 %75, %v70
    %v77 = vpop.permute.xlu0 %76
    %78 = vset.pattern.permute.xlu0 0
    %79 = vperm.xlu0 %78, %v72
    %v80 = vpop.permute.xlu0 %79
    %v81 = vlaneseq
    %v82 = vshrl.u32 %v81, 7
    %v83 = vsub.s32 %v40, %v82
    %v84 = vrot.slane %v77, %v83
    %v85 = vlaneseq
    %v86 = vshrl.u32 %v85, 7
    %v87 = vsub.s32 %v40, %v86
    %v88 = vrot.slane %v80, %v87
    %v89 = vsel %vm49, %v88, %v84
    %v91 = vsel %vm52, %v89, 0.0
    %92 = vadd.xlane.f32.xlu0 %v91
    %v93 = vpop.xlane.xlu0 %92
    %v94 = vrcp.pop %v93
    %v96 = vlaneseq
    %v97 = vshrl.u32 %v96, 7
    %v98 = vsub.s32 0, %v97
    %v99 = vrot.slane %v94, %v98
    %v100 = vlaneseq
    %v101 = vshrl.u32 %v100, 7
    %v102 = vsub.s32 1, %v101
    %v103 = vrot.slane %v94, %v102
    %v106 = vmul.f32 %v70, %v99
    %v107 = vmul.f32 %v72, %v103
    %110 = vset.pattern.permute.xlu0 0
    %111 = vperm.xlu0 %110, %v106
    %v112 = vpop.permute.xlu0 %111
    %113 = vset.pattern.permute.xlu0 0
    %114 = vperm.xlu0 %113, %v107
    %v115 = vpop.permute.xlu0 %114
    %v116 = vlaneseq
    %v117 = vshrl.u32 %v116, 7
    %v118 = vsub.s32 %v40, %v117
    %v119 = vrot.slane %v112, %v118
    %v120 = vlaneseq
    %v121 = vshrl.u32 %v120, 7
    %v122 = vsub.s32 %v40, %v121
    %v123 = vrot.slane %v115, %v122
    %v124 = vsel %vm49, %v123, %v119
    %126 = vst.msk [vmem:[#allocation2] sm:$0x3] %vm52, %v124
    // Predicated region
    $region10: #{fwd.1} parent=1 // pred_check
      _
    $region11: #{fwd.1} parent=1 // pred_check_branch
      %128 = sbr.rel (0) target = $region13
    $region12: #{fwd.1} parent=1 // pred_region
      %s130 = ssub.s32 32, 32
      %131 = vsyncadd [#allocation3], %s130
      %s133 = sshll.u32 [#allocation2], 4
      %s134 = int_to_ptr.vmem [resolvable:$true] %s133
      %136 = dma.vmem_to_hbm [thread:$0]  %s134, 32, %s2, [#allocation3]
    $region13: #{fwd.1} parent=1 // pred_fallthru
      _
    // Predicated region
    $region14: #{fwd.1} parent=1 // pred_check
      _
    $region15: #{fwd.1} parent=1 // pred_check_branch
      %138 = sbr.rel (0) target = $region17
    $region16: #{fwd.1} parent=1 // pred_region
      %139 = dma.done [#allocation3], 32
    $region17: #{fwd.1} parent=1 // pred_fallthru
      _
    %140 = vsyncpa [#allocation3], 1

</llo_original>
